<compile_context>
chip_gen: v5e
topology: v5e:2x2
jax: 0.10.0
libtpu: 0.0.40
codegen_flags: <defaults>
</compile_context>

<pallas_src>
import functools

import jax
import jax.numpy as jnp
from jax.experimental import pallas as pl
from jax.experimental.pallas import tpu as pltpu

EPS = 1e-3


def _vmem_capacity_bytes():
    """Physical VMEM of the local TPU generation (conservative fallback)."""
    try:
        return int(pltpu.get_tpu_info().vmem_capacity_bytes)
    except Exception:
        return 64 * 1024 * 1024  # v7x per-core physical VMEM


# --------------------------------------------------------------------------
# Fast path: whole tensor in VMEM, one grid step, two-pass variance.
# --------------------------------------------------------------------------
def _bn_fast_cl_kernel(x_ref, w_ref, b_ref, o_ref, *, inv_count, eps):
    # Channels-last: x_ref (N*HW, C); C (multiple of 128 for this net) sits
    # dense on lanes, the per-channel reduction runs over sublanes.
    x = x_ref[...].astype(jnp.float32)
    mean = jnp.sum(x, axis=0, keepdims=True) * inv_count           # (1, C)
    d = x - mean
    var = jnp.sum(d * d, axis=0, keepdims=True) * inv_count        # two-pass
    scale = jax.lax.rsqrt(var + eps) * w_ref[...].astype(jnp.float32)
    shift = b_ref[...].astype(jnp.float32) - mean * scale
    if o_ref.dtype == jnp.bfloat16:
        o_ref[...] = x_ref[...] * scale.astype(jnp.bfloat16) + shift.astype(jnp.bfloat16)
    else:
        o_ref[...] = (x * scale + shift).astype(o_ref.dtype)


def _bn_fast_nc_kernel(x_ref, w_ref, b_ref, o_ref, *, inv_count, eps):
    # NCHW-flat: x_ref (N, C, HW) with HW >= 128 on lanes (already lane-dense).
    x = x_ref[...].astype(jnp.float32)
    s = jnp.sum(jnp.sum(x, axis=-1, keepdims=True), axis=0, keepdims=True)
    mean = s * inv_count                                            # (1, C, 1)
    d = x - mean
    q = jnp.sum(jnp.sum(d * d, axis=-1, keepdims=True), axis=0, keepdims=True)
    var = q * inv_count                                             # two-pass
    scale = jax.lax.rsqrt(var + eps) * w_ref[...].astype(jnp.float32)
    shift = b_ref[...].astype(jnp.float32) - mean * scale
    if o_ref.dtype == jnp.bfloat16:
        o_ref[...] = x_ref[...] * scale.astype(jnp.bfloat16) + shift.astype(jnp.bfloat16)
    else:
        o_ref[...] = (x * scale + shift).astype(o_ref.dtype)


def _batchnorm_fast(x_nchw, weight, bias, eps):
    N, C, H, W = x_nchw.shape
    HW = H * W
    inv_count = 1.0 / float(N * HW)
    params = pltpu.CompilerParams(dimension_semantics=("arbitrary",))

    if HW < 128:
        # Lane-dense channels-last presentation (the tiny transpose is
        # negligible at fits-in-VMEM sizes).
        x2 = jnp.transpose(x_nchw, (0, 2, 3, 1)).reshape(N * HW, C)
        w2 = weight.astype(jnp.float32).reshape(1, C)
        b2 = bias.astype(jnp.float32).reshape(1, C)
        kernel = functools.partial(_bn_fast_cl_kernel, inv_count=inv_count, eps=float(eps))
        out2 = pl.pallas_call(
            kernel,
            out_shape=jax.ShapeDtypeStruct((N * HW, C), x_nchw.dtype),
            grid=(1,),
            in_specs=[
                pl.BlockSpec((N * HW, C), lambda i: (0, 0)),
                pl.BlockSpec((1, C), lambda i: (0, 0)),
                pl.BlockSpec((1, C), lambda i: (0, 0)),
            ],
            out_specs=pl.BlockSpec((N * HW, C), lambda i: (0, 0)),
            compiler_params=params,
        )(x2, w2, b2)
        return jnp.transpose(out2.reshape(N, H, W, C), (0, 3, 1, 2))

    x3 = x_nchw.reshape(N, C, HW)                    # free reshape, no transpose
    w3 = weight.astype(jnp.float32).reshape(1, C, 1)
    b3 = bias.astype(jnp.float32).reshape(1, C, 1)
    kernel = functools.partial(_bn_fast_nc_kernel, inv_count=inv_count, eps=float(eps))
    out3 = pl.pallas_call(
        kernel,
        out_shape=jax.ShapeDtypeStruct((N, C, HW), x_nchw.dtype),
        grid=(1,),
        in_specs=[
            pl.BlockSpec((N, C, HW), lambda i: (0, 0, 0)),
            pl.BlockSpec((1, C, 1), lambda i: (0, 0, 0)),
            pl.BlockSpec((1, C, 1), lambda i: (0, 0, 0)),
        ],
        out_specs=pl.BlockSpec((N, C, HW), lambda i: (0, 0, 0)),
        compiler_params=params,
    )(x3, w3, b3)
    return out3.reshape(N, C, H, W)


# --------------------------------------------------------------------------
# Streaming path for tensors that do not fit in VMEM: stats call + apply call.
# --------------------------------------------------------------------------
def _bn_stats_kernel(x_ref, w_ref, b_ref, ss_ref, *, hw, inv_count, eps):
    n = pl.program_id(0)
    j = pl.program_id(1)
    last = (n == pl.num_programs(0) - 1) & (j == pl.num_programs(1) - 1)

    @pl.when((n == 0) & (j == 0))
    def _():
        ss_ref[...] = jnp.zeros_like(ss_ref)

    x = x_ref[...].astype(jnp.float32)                       # (1, C, thw)
    thw = x.shape[-1]
    lane = jax.lax.broadcasted_iota(jnp.int32, x.shape, 2)
    x = jnp.where(j * thw + lane < hw, x, 0.0)               # mask padded tail
    ss_ref[0:1] += jnp.sum(x, axis=-1, keepdims=True)
    ss_ref[1:2] += jnp.sum(x * x, axis=-1, keepdims=True)

    @pl.when(last)
    def _():
        # One-pass biased variance; adequate for activations with eps=1e-3.
        # TODO(synk): switch to a shifted (pivoted) accumulation if |mean|>>std.
        mean = ss_ref[0:1] * inv_count
        var = ss_ref[1:2] * inv_count - mean * mean
        scale = jax.lax.rsqrt(var + eps) * w_ref[...].astype(jnp.float32)
        shift = b_ref[...].astype(jnp.float32) - mean * scale
        ss_ref[0:1] = scale
        ss_ref[1:2] = shift


def _bn_apply_kernel(x_ref, ss_ref, o_ref):
    scale = ss_ref[0:1]
    shift = ss_ref[1:2]
    if o_ref.dtype == jnp.bfloat16:
        o_ref[...] = x_ref[...] * scale.astype(jnp.bfloat16) + shift.astype(jnp.bfloat16)
    else:
        o_ref[...] = (x_ref[...].astype(jnp.float32) * scale + shift).astype(o_ref.dtype)


def _batchnorm_streaming(x_nchw, weight, bias, eps, vmem_cap):
    N, C, H, W = x_nchw.shape
    HW = H * W
    inv_count = 1.0 / float(N * HW)

    x3 = x_nchw.reshape(N, C, HW)
    w3 = weight.astype(jnp.float32).reshape(1, C, 1)
    b3 = bias.astype(jnp.float32).reshape(1, C, 1)

    # Generation-aware VMEM budgeting (v7x: 64 MiB physical; v5e/v6e: 128 MiB
    # physical but 16-32 MiB default scoped limit -> raise it explicitly).
    vmem_limit = int(min(vmem_cap // 2, 64 * 1024 * 1024))
    buf_budget = vmem_limit // 12          # 3 input bufs + 2 output bufs + headroom
    if HW <= 128:
        thw = HW
    else:
        max_lanes = max(128, (buf_budget // (C * 4)) // 128 * 128)
        thw = min(max_lanes, (HW // 128) * 128)
    n_j = pl.cdiv(HW, thw)                 # cdiv grid + masked tail (no full-HW fallback)

    stats_kernel = functools.partial(
        _bn_stats_kernel, hw=HW, inv_count=inv_count, eps=float(eps))
    scale_shift = pl.pallas_call(
        stats_kernel,
        out_shape=jax.ShapeDtypeStruct((2, C, 1), jnp.float32),
        grid=(N, n_j),
        in_specs=[
            pl.BlockSpec((1, C, thw), lambda n, j: (n, 0, j),
                         pipeline_mode=pl.Buffered(3)),
            pl.BlockSpec((1, C, 1), lambda n, j: (0, 0, 0)),
            pl.BlockSpec((1, C, 1), lambda n, j: (0, 0, 0)),
        ],
        # Constant block index -> the (2, C, 1) accumulator stays resident in
        # VMEM and is flushed once at the end (standard accumulator pattern).
        out_specs=pl.BlockSpec((2, C, 1), lambda n, j: (0, 0, 0)),
        compiler_params=pltpu.CompilerParams(
            dimension_semantics=("arbitrary", "arbitrary"),
            vmem_limit_bytes=vmem_limit,
        ),
    )(x3, w3, b3)

    out3 = pl.pallas_call(
        _bn_apply_kernel,
        out_shape=jax.ShapeDtypeStruct((N, C, HW), x_nchw.dtype),
        grid=(N, n_j),
        in_specs=[
            pl.BlockSpec((1, C, thw), lambda n, j: (n, 0, j)),
            pl.BlockSpec((2, C, 1), lambda n, j: (0, 0, 0)),
        ],
        out_specs=pl.BlockSpec((1, C, thw), lambda n, j: (n, 0, j)),
        compiler_params=pltpu.CompilerParams(
            dimension_semantics=("parallel", "parallel"),   # shards across v7x's 2 TCs
            vmem_limit_bytes=vmem_limit,
        ),
    )(x3, scale_shift)
    return out3.reshape(N, C, H, W)


def batchnorm2d(x_nchw, weight, bias, eps=EPS, force_streaming=False):
    """BatchNorm2d forward (training-mode batch stats), NCHW in / NCHW out."""
    N, C, H, W = x_nchw.shape
    HW = H * W
    vmem_cap = _vmem_capacity_bytes()
    fast_budget = min(vmem_cap // 8, 8 * 1024 * 1024)
    if not force_streaming and N * C * HW * 4 <= fast_budget:
        return _batchnorm_fast(x_nchw, weight, bias, eps)
    return _batchnorm_streaming(x_nchw, weight, bias, eps, vmem_cap)


def _reference_bn(x, w, b, eps):
    C = x.shape[1]
    mean = jnp.mean(x, axis=(0, 2, 3), keepdims=True)
    var = jnp.mean(jnp.square(x - mean), axis=(0, 2, 3), keepdims=True)
    return (x - mean) / jnp.sqrt(var + eps) * w.reshape(1, C, 1, 1) + b.reshape(1, C, 1, 1)


if __name__ == "__main__":
    key = jax.random.PRNGKey(0)
    k1, k2, k3, k4 = jax.random.split(key, 4)

    # Shape from the original module: (1, 384, 7, 7) -> fast (single-block) path.
    N, C, H, W = 1, 384, 7, 7
    x = jax.random.normal(k1, (N, C, H, W), dtype=jnp.float32)
    weight = 1.0 + 0.1 * jax.random.normal(k2, (C,), dtype=jnp.float32)
    bias = 0.05 * jax.random.normal(k3, (C,), dtype=jnp.float32)

    # TODO(synk): running_mean/running_var (momentum=0.1) buffer updates are a
    # training side-effect and do not affect the returned tensor; not emitted.
    out = jax.block_until_ready(batchnorm2d(x, weight, bias))
    ref = _reference_bn(x, weight, bias, EPS)
    assert out.shape == (N, C, H, W)
    assert jnp.max(jnp.abs(out - ref)) < 1e-4

    # Also exercise the streaming (large-tensor) path, including tail masking
    # (HW = 169 is not a multiple of 128) and multi-batch accumulation.
    x2 = jax.random.normal(k4, (2, C, 13, 13), dtype=jnp.float32)
    out2 = jax.block_until_ready(batchnorm2d(x2, weight, bias, force_streaming=True))
    ref2 = _reference_bn(x2, weight, bias, EPS)
    assert out2.shape == x2.shape
    assert jnp.max(jnp.abs(out2 - ref2)) < 2e-4

    print("KERNEL_OK")
</pallas_src>

<mosaic_0001>
module attributes {stable_mosaic.version = 11 : i64} {
  func.func @_bn_fast_cl_kernel(%arg0: i32, %arg1: memref<49x384xf32, #tpu.memory_space<vmem>>, %arg2: memref<1x384xf32, #tpu.memory_space<vmem>>, %arg3: memref<1x384xf32, #tpu.memory_space<vmem>>, %arg4: memref<49x384xf32, #tpu.memory_space<vmem>>) attributes {dimension_semantics = [#tpu.dimension_semantics<arbitrary>], iteration_bounds = array<i64: 1>, scalar_prefetch = 0 : i64, scratch_operands = 0 : i64, tpu.core_type = #tpu.core_type<tc>, window_params = [{pipeline_mode = #tpu.pipeline_mode<synchronous>, transform_indices = @transform_0, window_bounds = array<i64: 49, 384>}, {pipeline_mode = #tpu.pipeline_mode<synchronous>, transform_indices = @transform_1, window_bounds = array<i64: 1, 384>}, {pipeline_mode = #tpu.pipeline_mode<synchronous>, transform_indices = @transform_2, window_bounds = array<i64: 1, 384>}, {pipeline_mode = #tpu.pipeline_mode<synchronous>, transform_indices = @transform_3, window_bounds = array<i64: 49, 384>}]} {
    %c0 = arith.constant 0 : index
    %c0_0 = arith.constant 0 : index
    %0 = vector.load %arg1[%c0, %c0_0] : memref<49x384xf32, #tpu.memory_space<vmem>>, vector<49x384xf32>
    %cst = arith.constant dense<0.000000e+00> : vector<384xf32>
    %1 = vector.multi_reduction <add>, %0, %cst [0] : vector<49x384xf32> to vector<384xf32>
    %2 = vector.shape_cast %1 : vector<384xf32> to vector<1x384xf32>
    %cst_1 = arith.constant 0.0204081628 : f32
    %3 = vector.broadcast %cst_1 : f32 to vector<1x384xf32>
    %4 = arith.mulf %2, %3 : vector<1x384xf32>
    %5 = vector.broadcast %4 : vector<1x384xf32> to vector<49x384xf32>
    %6 = arith.subf %0, %5 : vector<49x384xf32>
    %7 = arith.mulf %6, %6 : vector<49x384xf32>
    %cst_2 = arith.constant dense<0.000000e+00> : vector<384xf32>
    %8 = vector.multi_reduction <add>, %7, %cst_2 [0] : vector<49x384xf32> to vector<384xf32>
    %9 = vector.shape_cast %8 : vector<384xf32> to vector<1x384xf32>
    %cst_3 = arith.constant 0.0204081628 : f32
    %10 = vector.broadcast %cst_3 : f32 to vector<1x384xf32>
    %11 = arith.mulf %9, %10 : vector<1x384xf32>
    %cst_4 = arith.constant 1.000000e-03 : f32
    %12 = vector.broadcast %cst_4 : f32 to vector<1x384xf32>
    %13 = arith.addf %11, %12 : vector<1x384xf32>
    %14 = math.rsqrt %13 : vector<1x384xf32>
    %c0_5 = arith.constant 0 : index
    %c0_6 = arith.constant 0 : index
    %15 = vector.load %arg2[%c0_5, %c0_6] : memref<1x384xf32, #tpu.memory_space<vmem>>, vector<1x384xf32>
    %16 = arith.mulf %14, %15 : vector<1x384xf32>
    %c0_7 = arith.constant 0 : index
    %c0_8 = arith.constant 0 : index
    %17 = vector.load %arg3[%c0_7, %c0_8] : memref<1x384xf32, #tpu.memory_space<vmem>>, vector<1x384xf32>
    %18 = arith.mulf %4, %16 : vector<1x384xf32>
    %19 = arith.subf %17, %18 : vector<1x384xf32>
    %20 = vector.broadcast %16 : vector<1x384xf32> to vector<49x384xf32>
    %21 = arith.mulf %0, %20 : vector<49x384xf32>
    %22 = vector.broadcast %19 : vector<1x384xf32> to vector<49x384xf32>
    %23 = arith.addf %21, %22 : vector<49x384xf32>
    %c0_9 = arith.constant 0 : index
    %c0_10 = arith.constant 0 : index
    %24 = vector.load %arg4[%c0_9, %c0_10] : memref<49x384xf32, #tpu.memory_space<vmem>>, vector<49x384xf32>
    tpu.vector_store %arg4[%c0_9, %c0_10], %23 {strides = array<i32>} : memref<49x384xf32, #tpu.memory_space<vmem>>, vector<49x384xf32>,
    return
  }
  func.func @transform_0(%arg0: i32) -> (i32, i32) {
    %c0_i32 = arith.constant 0 : i32
    %c0_i32_0 = arith.constant 0 : i32
    %c0_i32_1 = arith.constant 0 : i32
    return %c0_i32, %c0_i32_0 : i32, i32
  }
  func.func @transform_1(%arg0: i32) -> (i32, i32) {
    %c0_i32 = arith.constant 0 : i32
    %c0_i32_0 = arith.constant 0 : i32
    %c0_i32_1 = arith.constant 0 : i32
    return %c0_i32, %c0_i32_0 : i32, i32
  }
  func.func @transform_2(%arg0: i32) -> (i32, i32) {
    %c0_i32 = arith.constant 0 : i32
    %c0_i32_0 = arith.constant 0 : i32
    %c0_i32_1 = arith.constant 0 : i32
    return %c0_i32, %c0_i32_0 : i32, i32
  }
  func.func @transform_3(%arg0: i32) -> (i32, i32) {
    %c0_i32 = arith.constant 0 : i32
    %c0_i32_0 = arith.constant 0 : i32
    %c0_i32_1 = arith.constant 0 : i32
    return %c0_i32, %c0_i32_0 : i32, i32
  }
}

</mosaic_0001>

<llo_original>
// kernel: tpu_custom_call.1
$region0: #{tpu_custom_call.1}
  #allocation0 [shape = 'u32[]', space=smem, size = 0x4, offset = 0x4, fixed_abs, tag = 'smem constant byte address 0x4 - core index']
  #allocation1 [shape = 'u32[72,128]{1,0:T(1,128)}', space=vmem, size = 0x9000, scoped, tag = 'internal scratch']
  %s0 = inlined_call_operand.hbm [shape: f32[49,384], index: 0, kind: input, shape index: {}]
  %s1 = inlined_call_operand.hbm [shape: f32[1,384], index: 1, kind: input, shape index: {}]
  %s2 = inlined_call_operand.hbm [shape: f32[1,384], index: 2, kind: input, shape index: {}]
  %s3 = inlined_call_operand.hbm [shape: f32[49,384], index: 3, kind: output, shape index: {}]
  %s4 = sld [smem:[#allocation0]]
  $region34: #{tpu_custom_call.1} parent=0
    _
  %s6 = ssub.s32 1, %s4
  %s7 = scalar_select 0, %s6, %s4
  $region1: #{tpu_custom_call.1} parent=0
    #allocation2 [shape = 'u8[86016]{0}', space=vmem, size = 0x15000, scoped, tag = 'input window, operand 0, single buffered']
    #allocation3 [shape = 's32[1]{0}', space=sflag, size = 0x4, scoped, tag = 'scoped memory for tpu_custom_call.1']
    #allocation4 [shape = 's32[1]{0}', space=sflag, size = 0x4, scoped, tag = 'scoped memory for tpu_custom_call.1']
    #allocation5 [shape = 'u8[1536]{0}', space=vmem, size = 0x800, scoped, tag = 'input window, operand 1, single buffered']
    #allocation6 [shape = 's32[1]{0}', space=sflag, size = 0x4, scoped, tag = 'scoped memory for tpu_custom_call.1']
    #allocation7 [shape = 'u8[1536]{0}', space=vmem, size = 0x800, scoped, tag = 'input window, operand 2, single buffered']
    #allocation8 [shape = 'u8[86016]{0}', space=vmem, size = 0x15000, scoped, tag = 'output window, operand 0, single buffered']
    %8 = vsyncpa [#allocation3], 0
    %9 = vsyncpa [#allocation6], 0
    %10 = vsyncpa [#allocation4], 0
    // Predicated region
    $region2: #{tpu_custom_call.1} parent=1 // pred_check
      _
    $region3: #{tpu_custom_call.1} parent=1 // pred_check_branch
      %12 = sbr.rel (0) target = $region5
    $region4: #{tpu_custom_call.1} parent=1 // pred_region
      %14 = vsyncadd [#allocation3], 0
      %s15 = sshll.u32 %s0, 4
      %s16 = int_to_ptr.hbm [resolvable:$true] %s15
      %s17 = sshll.u32 [#allocation2], 4
      %s18 = int_to_ptr.vmem [resolvable:$true] %s17
      %23 = dma.hbm_to_vmem [thread:$0]  %s16, 2688, %s18, [#allocation3], 384, 384, 24
    $region5: #{tpu_custom_call.1} parent=1 // pred_fallthru
      _
    // Predicated region
    $region6: #{tpu_custom_call.1} parent=1 // pred_check
      _
    $region7: #{tpu_custom_call.1} parent=1 // pred_check_branch
      %25 = sbr.rel (0) target = $region9
    $region8: #{tpu_custom_call.1} parent=1 // pred_region
      %27 = vsyncadd [#allocation6], 0
      %s29 = sshll.u32 %s1, 4
      %s30 = int_to_ptr.hbm [resolvable:$true] %s29
      %s31 = sshll.u32 [#allocation5], 4
      %s32 = int_to_ptr.vmem [resolvable:$true] %s31
      %34 = dma.hbm_to_vmem [thread:$0]  %s30, 48, %s32, [#allocation6]
    $region9: #{tpu_custom_call.1} parent=1 // pred_fallthru
      _
    // Predicated region
    $region10: #{tpu_custom_call.1} parent=1 // pred_check
      _
    $region11: #{tpu_custom_call.1} parent=1 // pred_check_branch
      %36 = sbr.rel (0) target = $region13
    $region12: #{tpu_custom_call.1} parent=1 // pred_region
      %38 = vsyncadd [#allocation6], 0
      %s40 = sshll.u32 %s2, 4
      %s41 = int_to_ptr.hbm [resolvable:$true] %s40
      %s42 = sshll.u32 [#allocation7], 4
      %s43 = int_to_ptr.vmem [resolvable:$true] %s42
      %45 = dma.hbm_to_vmem [thread:$0]  %s41, 48, %s43, [#allocation6]
    $region13: #{tpu_custom_call.1} parent=1 // pred_fallthru
      _
    // Predicated region
    $region14: #{tpu_custom_call.1} parent=1 // pred_check
      _
    $region15: #{tpu_custom_call.1} parent=1 // pred_check_branch
      %47 = sbr.rel (0) target = $region17
    $region16: #{tpu_custom_call.1} parent=1 // pred_region
      %49 = dma.done [#allocation3], 2688
    $region17: #{tpu_custom_call.1} parent=1 // pred_fallthru
      _
    // Predicated region
    $region18: #{tpu_custom_call.1} parent=1 // pred_check
      _
    $region19: #{tpu_custom_call.1} parent=1 // pred_check_branch
      %51 = sbr.rel (0) target = $region21
    $region20: #{tpu_custom_call.1} parent=1 // pred_region
      %53 = dma.done [#allocation6], 48
    $region21: #{tpu_custom_call.1} parent=1 // pred_fallthru
      _
    // Predicated region
    $region22: #{tpu_custom_call.1} parent=1 // pred_check
      _
    $region23: #{tpu_custom_call.1} parent=1 // pred_check_branch
      %55 = sbr.rel (0) target = $region25
    $region24: #{tpu_custom_call.1} parent=1 // pred_region
      %57 = dma.done [#allocation6], 48
    $region25: #{tpu_custom_call.1} parent=1 // pred_fallthru
      _
    %v58 = vld [vmem:[#allocation2] sm:$0xff]
    %v59 = vld [vmem:[#allocation2 + $0x8] sm:$0xff]
    %v60 = vld [vmem:[#allocation2 + $0x10] sm:$0xff]
    %v61 = vld [vmem:[#allocation2 + $0x18] sm:$0xff]
    %v62 = vld [vmem:[#allocation2 + $0x20] sm:$0xff]
    %v63 = vld [vmem:[#allocation2 + $0x28] sm:$0xff]
    %v64 = vld [vmem:[#allocation2 + $0x30] sm:$0xff]
    %v65 = vld [vmem:[#allocation2 + $0x38] sm:$0xff]
    %v66 = vld [vmem:[#allocation2 + $0x40] sm:$0xff]
    %v67 = vld [vmem:[#allocation2 + $0x48] sm:$0xff]
    %v68 = vld [vmem:[#allocation2 + $0x50] sm:$0xff]
    %v69 = vld [vmem:[#allocation2 + $0x58] sm:$0xff]
    %v70 = vld [vmem:[#allocation2 + $0x60] sm:$0xff]
    %v71 = vld [vmem:[#allocation2 + $0x68] sm:$0xff]
    %v72 = vld [vmem:[#allocation2 + $0x70] sm:$0xff]
    %v73 = vld [vmem:[#allocation2 + $0x78] sm:$0xff]
    %v74 = vld [vmem:[#allocation2 + $0x80] sm:$0xff]
    %v75 = vld [vmem:[#allocation2 + $0x88] sm:$0xff]
    %v76 = vld [vmem:[#allocation2 + $0x90] sm:$0x1]
    %v77 = vld [vmem:[#allocation2 + $0x98] sm:$0x1]
    %v78 = vld [vmem:[#allocation2 + $0xa0] sm:$0x1]
    %v79 = vadd.f32 %v58, %v61
    %v80 = vadd.f32 %v79, %v64
    %v81 = vadd.f32 %v80, %v67
    %v82 = vadd.f32 %v81, %v70
    %v83 = vadd.f32 %v82, %v73
    %vm84 = vcmask 1040384
    %v85 = vsel %vm84, %v76, 0.0
    %v86 = vadd.f32 %v83, %v85
    %v87 = vrot.slane %v86, 4
    %v88 = vadd.f32 %v86, %v87
    %v89 = vrot.slane %v88, 2
    %v90 = vadd.f32 %v88, %v89
    %v91 = vrot.slane %v90, 1
    %v92 = vadd.f32 %v90, %v91
    %v93 = vadd.f32 %v59, %v62
    %v94 = vadd.f32 %v93, %v65
    %v95 = vadd.f32 %v94, %v68
    %v96 = vadd.f32 %v95, %v71
    %v97 = vadd.f32 %v96, %v74
    %v98 = vsel %vm84, %v77, 0.0
    %v99 = vadd.f32 %v97, %v98
    %v100 = vrot.slane %v99, 4
    %v101 = vadd.f32 %v99, %v100
    %v102 = vrot.slane %v101, 2
    %v103 = vadd.f32 %v101, %v102
    %v104 = vrot.slane %v103, 1
    %v105 = vadd.f32 %v103, %v104
    %v106 = vadd.f32 %v60, %v63
    %v107 = vadd.f32 %v106, %v66
    %v108 = vadd.f32 %v107, %v69
    %v109 = vadd.f32 %v108, %v72
    %v110 = vadd.f32 %v109, %v75
    %v111 = vsel %vm84, %v78, 0.0
    %v112 = vadd.f32 %v110, %v111
    %v113 = vrot.slane %v112, 4
    %v114 = vadd.f32 %v112, %v113
    %v115 = vrot.slane %v114, 2
    %v116 = vadd.f32 %v114, %v115
    %v117 = vrot.slane %v116, 1
    %v118 = vadd.f32 %v116, %v117
    %v119 = vmul.f32 %v92, 0.020408163
    %v120 = vmul.f32 %v105, 0.020408163
    %v121 = vmul.f32 %v118, 0.020408163
    %v122 = vsub.f32 %v58, %v119
    %v123 = vsub.f32 %v59, %v120
    %v124 = vsub.f32 %v60, %v121
    %v125 = vsub.f32 %v61, %v119
    %v126 = vsub.f32 %v62, %v120
    %v127 = vsub.f32 %v63, %v121
    %v128 = vsub.f32 %v64, %v119
    %v129 = vsub.f32 %v65, %v120
    %v130 = vsub.f32 %v66, %v121
    %v131 = vsub.f32 %v67, %v119
    %v132 = vsub.f32 %v68, %v120
    %v133 = vsub.f32 %v69, %v121
    %v134 = vsub.f32 %v70, %v119
    %v135 = vsub.f32 %v71, %v120
    %v136 = vsub.f32 %v72, %v121
    %v137 = vsub.f32 %v73, %v119
    %v138 = vsub.f32 %v74, %v120
    %v139 = vsub.f32 %v75, %v121
    %v140 = vsub.f32 %v76, %v119
    %v141 = vsub.f32 %v77, %v120
    %v142 = vsub.f32 %v78, %v121
    %v143 = vmul.f32 %v122, %v122
    %v144 = vmul.f32 %v123, %v123
    %v145 = vmul.f32 %v124, %v124
    %v146 = vmul.f32 %v125, %v125
    %v147 = vmul.f32 %v126, %v126
    %v148 = vmul.f32 %v127, %v127
    %v149 = vmul.f32 %v128, %v128
    %v150 = vmul.f32 %v129, %v129
    %v151 = vmul.f32 %v130, %v130
    %v152 = vmul.f32 %v131, %v131
    %v153 = vmul.f32 %v132, %v132
    %v154 = vmul.f32 %v133, %v133
    %v155 = vmul.f32 %v134, %v134
    %v156 = vmul.f32 %v135, %v135
    %v157 = vmul.f32 %v136, %v136
    %v158 = vmul.f32 %v137, %v137
    %v159 = vmul.f32 %v138, %v138
    %v160 = vmul.f32 %v139, %v139
    %v161 = vmul.f32 %v140, %v140
    %v162 = vmul.f32 %v141, %v141
    %v163 = vmul.f32 %v142, %v142
    %v164 = vadd.f32 %v143, %v146
    %v165 = vadd.f32 %v164, %v149
    %v166 = vadd.f32 %v165, %v152
    %v167 = vadd.f32 %v166, %v155
    %v168 = vadd.f32 %v167, %v158
    %v169 = vsel %vm84, %v161, 0.0
    %v170 = vadd.f32 %v168, %v169
    %v171 = vrot.slane %v170, 4
    %v172 = vadd.f32 %v170, %v171
    %v173 = vrot.slane %v172, 2
    %v174 = vadd.f32 %v172, %v173
    %v175 = vrot.slane %v174, 1
    %v176 = vadd.f32 %v174, %v175
    %v177 = vadd.f32 %v144, %v147
    %v178 = vadd.f32 %v177, %v150
    %v179 = vadd.f32 %v178, %v153
    %v180 = vadd.f32 %v179, %v156
    %v181 = vadd.f32 %v180, %v159
    %v182 = vsel %vm84, %v162, 0.0
    %v183 = vadd.f32 %v181, %v182
    %v184 = vrot.slane %v183, 4
    %v185 = vadd.f32 %v183, %v184
    %v186 = vrot.slane %v185, 2
    %v187 = vadd.f32 %v185, %v186
    %v188 = vrot.slane %v187, 1
    %v189 = vadd.f32 %v187, %v188
    %v190 = vadd.f32 %v145, %v148
    %v191 = vadd.f32 %v190, %v151
    %v192 = vadd.f32 %v191, %v154
    %v193 = vadd.f32 %v192, %v157
    %v194 = vadd.f32 %v193, %v160
    %v195 = vsel %vm84, %v163, 0.0
    %v196 = vadd.f32 %v194, %v195
    %v197 = vrot.slane %v196, 4
    %v198 = vadd.f32 %v196, %v197
    %v199 = vrot.slane %v198, 2
    %v200 = vadd.f32 %v198, %v199
    %v201 = vrot.slane %v200, 1
    %v202 = vadd.f32 %v200, %v201
    %v203 = vmul.f32 %v176, 0.020408163
    %v204 = vmul.f32 %v189, 0.020408163
    %v205 = vmul.f32 %v202, 0.020408163
    %v206 = vadd.f32 %v203, 0.001
    %v207 = vadd.f32 %v204, 0.001
    %v208 = vadd.f32 %v205, 0.001
    %v209 = vrsqrt.pop %v206
    %v210 = vmul.f32 %v209, %v206
    %v211 = vmul.f32 %v210, %v209
    %v212 = vmul.f32 0.5, %v211
    %v213 = vsub.f32 1.5, %v212
    %v214 = vmul.f32 %v209, %v213
    %vm215 = vweird.f32 %v206
    %vm216 = vweird.f32 %v209
    %vm217 = vmor %vm215, %vm216
    %v218 = vsel %vm217, %v209, %v214
    %v219 = vrsqrt.pop %v207
    %v220 = vmul.f32 %v219, %v207
    %v221 = vmul.f32 %v220, %v219
    %v222 = vmul.f32 0.5, %v221
    %v223 = vsub.f32 1.5, %v222
    %v224 = vmul.f32 %v219, %v223
    %vm225 = vweird.f32 %v207
    %vm226 = vweird.f32 %v219
    %vm227 = vmor %vm225, %vm226
    %v228 = vsel %vm227, %v219, %v224
    %v229 = vrsqrt.pop %v208
    %v230 = vmul.f32 %v229, %v208
    %v231 = vmul.f32 %v230, %v229
    %v232 = vmul.f32 0.5, %v231
    %v233 = vsub.f32 1.5, %v232
    %v234 = vmul.f32 %v229, %v233
    %vm235 = vweird.f32 %v208
    %vm236 = vweird.f32 %v229
    %vm237 = vmor %vm235, %vm236
    %v238 = vsel %vm237, %v229, %v234
    %v239 = vld [vmem:[#allocation5] sm:$0x7]
    %v241 = vperm.slane %v239, 0
    %v242 = vperm.slane %v239, 1
    %v243 = vperm.slane %v239, 2
    %v247 = vmul.f32 %v218, %v241
    %v248 = vmul.f32 %v228, %v242
    %v249 = vmul.f32 %v238, %v243
    %v250 = vld [vmem:[#allocation7] sm:$0x7]
    %v251 = vmul.f32 %v119, %v247
    %v252 = vmul.f32 %v120, %v248
    %v253 = vmul.f32 %v121, %v249
    %v257 = vrot.slane %v252, 7
    %v258 = vrot.slane %v253, 6
    %v259 = vsel %vm84, %v251, %v257
    %vm260 = vcmask 1041408
    %v261 = vsel %vm260, %v259, %v258
    %v263 = vsub.f32 %v250, %v261
    %v264 = vperm.slane %v247, 0
    %v265 = vperm.slane %v248, 0
    %v266 = vperm.slane %v249, 0
    %v267 = vmul.f32 %v58, %v264
    %v268 = vmul.f32 %v59, %v265
    %v269 = vmul.f32 %v60, %v266
    %v270 = vmul.f32 %v61, %v264
    %v271 = vmul.f32 %v62, %v265
    %v272 = vmul.f32 %v63, %v266
    %v273 = vmul.f32 %v64, %v264
    %v274 = vmul.f32 %v65, %v265
    %v275 = vmul.f32 %v66, %v266
    %v276 = vmul.f32 %v67, %v264
    %v277 = vmul.f32 %v68, %v265
    %v278 = vmul.f32 %v69, %v266
    %v279 = vmul.f32 %v70, %v264
    %v280 = vmul.f32 %v71, %v265
    %v281 = vmul.f32 %v72, %v266
    %v282 = vmul.f32 %v73, %v264
    %v283 = vmul.f32 %v74, %v265
    %v284 = vmul.f32 %v75, %v266
    %v285 = vmul.f32 %v76, %v264
    %v286 = vmul.f32 %v77, %v265
    %v287 = vmul.f32 %v78, %v266
    %v289 = vperm.slane %v263, 0
    %v290 = vperm.slane %v263, 1
    %v291 = vperm.slane %v263, 2
    %v295 = vadd.f32 %v267, %v289
    %v296 = vadd.f32 %v268, %v290
    %v297 = vadd.f32 %v269, %v291
    %v298 = vadd.f32 %v270, %v289
    %v299 = vadd.f32 %v271, %v290
    %v300 = vadd.f32 %v272, %v291
    %v301 = vadd.f32 %v273, %v289
    %v302 = vadd.f32 %v274, %v290
    %v303 = vadd.f32 %v275, %v291
    %v304 = vadd.f32 %v276, %v289
    %v305 = vadd.f32 %v277, %v290
    %v306 = vadd.f32 %v278, %v291
    %v307 = vadd.f32 %v279, %v289
    %v308 = vadd.f32 %v280, %v290
    %v309 = vadd.f32 %v281, %v291
    %v310 = vadd.f32 %v282, %v289
    %v311 = vadd.f32 %v283, %v290
    %v312 = vadd.f32 %v284, %v291
    %v313 = vadd.f32 %v285, %v289
    %v314 = vadd.f32 %v286, %v290
    %v315 = vadd.f32 %v287, %v291
    %316 = vst [vmem:[#allocation8] sm:$0xff] %v295
    %317 = vst [vmem:[#allocation8 + $0x8] sm:$0xff] %v296
    %318 = vst [vmem:[#allocation8 + $0x10] sm:$0xff] %v297
    %319 = vst [vmem:[#allocation8 + $0x18] sm:$0xff] %v298
    %320 = vst [vmem:[#allocation8 + $0x20] sm:$0xff] %v299
    %321 = vst [vmem:[#allocation8 + $0x28] sm:$0xff] %v300
    %322 = vst [vmem:[#allocation8 + $0x30] sm:$0xff] %v301
    %323 = vst [vmem:[#allocation8 + $0x38] sm:$0xff] %v302
    %324 = vst [vmem:[#allocation8 + $0x40] sm:$0xff] %v303
    %325 = vst [vmem:[#allocation8 + $0x48] sm:$0xff] %v304
    %326 = vst [vmem:[#allocation8 + $0x50] sm:$0xff] %v305
    %327 = vst [vmem:[#allocation8 + $0x58] sm:$0xff] %v306
    %328 = vst [vmem:[#allocation8 + $0x60] sm:$0xff] %v307
    %329 = vst [vmem:[#allocation8 + $0x68] sm:$0xff] %v308
    %330 = vst [vmem:[#allocation8 + $0x70] sm:$0xff] %v309
    %331 = vst [vmem:[#allocation8 + $0x78] sm:$0xff] %v310
    %332 = vst [vmem:[#allocation8 + $0x80] sm:$0xff] %v311
    %333 = vst [vmem:[#allocation8 + $0x88] sm:$0xff] %v312
    %334 = vst [vmem:[#allocation8 + $0x90] sm:$0x1] %v313
    %335 = vst [vmem:[#allocation8 + $0x98] sm:$0x1] %v314
    %336 = vst [vmem:[#allocation8 + $0xa0] sm:$0x1] %v315
    // Predicated region
    $region26: #{tpu_custom_call.1} parent=1 // pred_check
      _
    $region27: #{tpu_custom_call.1} parent=1 // pred_check_branch
      %338 = sbr.rel (0) target = $region29
    $region28: #{tpu_custom_call.1} parent=1 // pred_region
      %340 = vsyncadd [#allocation4], 0
      %s341 = sshll.u32 [#allocation8], 4
      %s342 = int_to_ptr.vmem [resolvable:$true] %s341
      %s343 = sshll.u32 %s3, 4
      %s344 = int_to_ptr.hbm [resolvable:$true] %s343
      %349 = dma.vmem_to_hbm [thread:$0]  %s342, 2688, %s344, [#allocation4], 384, 384, 24
    $region29: #{tpu_custom_call.1} parent=1 // pred_fallthru
      _
    // Predicated region
    $region30: #{tpu_custom_call.1} parent=1 // pred_check
      _
    $region31: #{tpu_custom_call.1} parent=1 // pred_check_branch
      %351 = sbr.rel (0) target = $region33
    $region32: #{tpu_custom_call.1} parent=1 // pred_region
      %353 = dma.done [#allocation4], 2688
    $region33: #{tpu_custom_call.1} parent=1 // pred_fallthru
      _
    %354 = vsyncpa [#allocation3], 1
    %355 = vsyncpa [#allocation6], 1
    %356 = vsyncpa [#allocation4], 1

</llo_original>
